<compile_context>
chip_gen: v7x
topology: tpu7x:2x2x1
jax: 0.10.0
libtpu: 0.0.40
codegen_flags: <defaults>
</compile_context>

<pallas_src>
import functools

import jax
import jax.numpy as jnp
from jax.experimental import pallas as pl
from jax.experimental.pallas import tpu as pltpu

BN_EPS = 1e-5
LEAKY_SLOPE = 0.01


def _round_up(n, m):
    return ((n + m - 1) // m) * m


def _actor_kernel(dims_pad, batch_valid, batch_pad, x_ref, vecs_ref, *refs):
    """Whole network, grid-less, fully resident in VMEM.

    dims_pad : static tuple of 128-padded widths [F_0, F_1, ..., F_last, A_pad]
    x_ref    : (B_pad, F_0) f32        -- zero-padded input activations
    vecs_ref : (R_pad, max(dims_pad)) f32 -- rows [gamma_i, beta_i, bias_i]*n, b_out
    refs     : n_hidden+1 weight refs, w_i (F_i, F_{i+1}) bf16 (zero-padded,
               (in, out) layout), followed by out_ref (B_pad, A_pad) f32.
    """
    n_hidden = len(dims_pad) - 2
    w_refs = refs[:n_hidden + 1]
    out_ref = refs[n_hidden + 1]

    x = x_ref[...]                      # (B_pad, F_0) f32
    vecs = vecs_ref[...]                # tiny; load once, slice statically

    need_mask = batch_valid != batch_pad
    if need_mask:
        rows = jax.lax.broadcasted_iota(jnp.int32, (batch_pad, 1), 0)
        mask = (rows < batch_valid).astype(jnp.float32)
        inv_n = jnp.float32(1.0 / batch_valid)

    for i in range(n_hidden):
        f_in = dims_pad[i]
        f_out = dims_pad[i + 1]
        gamma = vecs[3 * i:3 * i + 1, :f_in]        # (1, F_i)
        beta = vecs[3 * i + 1:3 * i + 2, :f_in]     # (1, F_i)
        bias = vecs[3 * i + 2:3 * i + 3, :f_out]    # (1, F_{i+1})

        # BatchNorm1d, training mode: batch statistics, biased variance.
        # Centered activation computed once and reused for the variance.
        if need_mask:
            mean = jnp.sum(x * mask, axis=0, keepdims=True) * inv_n
            xc = x - mean
            var = jnp.sum(xc * xc * mask, axis=0, keepdims=True) * inv_n
        else:
            mean = jnp.mean(x, axis=0, keepdims=True)
            xc = x - mean
            var = jnp.mean(xc * xc, axis=0, keepdims=True)
        # Fold rsqrt(var+eps)*gamma on the (1,F) row first -> one (B,F) mul.
        scale = jax.lax.rsqrt(var + BN_EPS) * gamma
        xn = xc * scale + beta

        # Linear (bf16 operands on the MXU, f32 accumulate) + LeakyReLU (f32 VPU).
        h = jnp.dot(xn.astype(jnp.bfloat16), w_refs[i][...],
                    preferred_element_type=jnp.float32) + bias
        x = jnp.where(h > 0, h, LEAKY_SLOPE * h)

    a_pad = dims_pad[-1]
    b_out = vecs[3 * n_hidden:3 * n_hidden + 1, :a_pad]
    y = jnp.dot(x.astype(jnp.bfloat16), w_refs[n_hidden][...],
                preferred_element_type=jnp.float32) + b_out
    out_ref[...] = jnp.tanh(y)          # lane-dense (B_pad, A_pad) store


def _pack_params(params, dims_pad, n_hidden):
    """Pack small vectors into one lane-padded f32 buffer and zero-pad each
    weight to its own (128-multiple in, 128-multiple out) bf16 slab."""
    vec_w = max(dims_pad)
    rows = 3 * n_hidden + 1
    rows_pad = _round_up(rows, 8)
    vecs = jnp.zeros((rows_pad, vec_w), jnp.float32)
    for i in range(n_hidden):
        f_in = params["bn_gamma"][i].shape[1]
        h_out = params["b"][i].shape[1]
        vecs = vecs.at[3 * i, :f_in].set(params["bn_gamma"][i][0])
        vecs = vecs.at[3 * i + 1, :f_in].set(params["bn_beta"][i][0])
        vecs = vecs.at[3 * i + 2, :h_out].set(params["b"][i][0])
    a = params["b_out"].shape[1]
    vecs = vecs.at[3 * n_hidden, :a].set(params["b_out"][0])

    w_list = []
    for i in range(n_hidden):
        k, n = params["w"][i].shape
        w = jnp.zeros((dims_pad[i], dims_pad[i + 1]), jnp.bfloat16)
        w = w.at[:k, :n].set(params["w"][i].astype(jnp.bfloat16))
        w_list.append(w)
    k, n = params["w_out"].shape
    w = jnp.zeros((dims_pad[n_hidden], dims_pad[n_hidden + 1]), jnp.bfloat16)
    w = w.at[:k, :n].set(params["w_out"].astype(jnp.bfloat16))
    w_list.append(w)
    return vecs, w_list


def actor_forward(x, params):
    """Run the Actor forward pass inside one Pallas kernel.

    x       : (B, state_size) float32
    params  : dict with keys
              'bn_gamma', 'bn_beta'   : list of (1, F_i)
              'w', 'b'                : list of (F_i, H_i), (1, H_i)  (W stored (in,out))
              'w_out', 'b_out'        : (H_last, A), (1, A)
    """
    n_hidden = len(params["w"])
    state_size = params["w"][0].shape[0]
    action_size = params["w_out"].shape[1]
    dims = [state_size] + [w.shape[1] for w in params["w"]] + [action_size]
    # Per-layer lane padding; final width capped at round_up(action_size,128).
    dims_pad = tuple(_round_up(d, 128) for d in dims)

    batch = x.shape[0]
    batch_pad = _round_up(max(batch, 8), 8)    # sublane-aligned batch

    x_pad = jnp.zeros((batch_pad, dims_pad[0]), jnp.float32)
    x_pad = x_pad.at[:batch, :state_size].set(x.astype(jnp.float32))

    vecs, w_list = _pack_params(params, dims_pad, n_hidden)

    kernel = functools.partial(_actor_kernel, dims_pad, batch, batch_pad)
    vmem_spec = pl.BlockSpec(memory_space=pltpu.MemorySpace.VMEM)

    # Size the scoped VMEM limit from the actual footprint (+25% + 2 MiB
    # headroom for Mosaic internal scratch), clamped to the chip's capacity
    # (64 MiB/TC on v7x, 128 MiB on v5e/v6e).
    a_pad = dims_pad[-1]
    total_bytes = (x_pad.size * 4 + vecs.size * 4
                   + sum(int(w.size) * 2 for w in w_list)
                   + batch_pad * a_pad * 4)
    try:
        vmem_cap = int(pltpu.get_tpu_info().vmem_capacity_bytes)
    except Exception:
        vmem_cap = 64 * 1024 * 1024
    vmem_limit = int(min(vmem_cap,
                         max(16 * 1024 * 1024,
                             int(1.25 * total_bytes) + (2 << 20))))

    out = pl.pallas_call(
        kernel,
        out_shape=jax.ShapeDtypeStruct((batch_pad, a_pad), jnp.float32),
        in_specs=[vmem_spec] * (2 + len(w_list)),
        out_specs=vmem_spec,
        compiler_params=pltpu.CompilerParams(vmem_limit_bytes=vmem_limit),
    )(x_pad, vecs, *w_list)

    return out[:batch, :action_size]


def init_actor_params(key, state_size, hidden_layers, action_size):
    """Deterministic init mirroring the PyTorch module's shapes.

    Hidden linears: U(-1/sqrt(out_features), 1/sqrt(out_features))
    (matches hidden_init, which uses weight.size()[0] == out_features).
    Output linear: U(-3e-3, 3e-3). BatchNorm: gamma=1, beta=0.
    """
    params = {"bn_gamma": [], "bn_beta": [], "w": [], "b": []}
    sizes = [state_size] + list(hidden_layers)
    keys = jax.random.split(key, 2 * len(hidden_layers) + 2)
    k = 0
    for fin, fout in zip(sizes[:-1], sizes[1:]):
        lim = 1.0 / jnp.sqrt(jnp.float32(fout))
        params["bn_gamma"].append(jnp.ones((1, fin), jnp.float32))
        params["bn_beta"].append(jnp.zeros((1, fin), jnp.float32))
        # stored as (in, out) — transpose of PyTorch's (out, in)
        params["w"].append(
            jax.random.uniform(keys[k], (fin, fout), jnp.float32, -lim, lim))
        params["b"].append(
            jax.random.uniform(keys[k + 1], (1, fout), jnp.float32, -lim, lim))
        k += 2
    params["w_out"] = jax.random.uniform(
        keys[k], (sizes[-1], action_size), jnp.float32, -3e-3, 3e-3)
    params["b_out"] = jax.random.uniform(
        keys[k + 1], (1, action_size), jnp.float32, -3e-3, 3e-3)
    return params


def actor_forward_ref(x, params, matmul_bf16=False):
    """Pure-JAX reference. matmul_bf16=True mirrors the kernel's operand cast."""
    n_hidden = len(params["w"])
    x = x.astype(jnp.float32)
    for i in range(n_hidden):
        mean = jnp.mean(x, axis=0, keepdims=True)
        var = jnp.mean((x - mean) ** 2, axis=0, keepdims=True)
        x = (x - mean) / jnp.sqrt(var + BN_EPS) * params["bn_gamma"][i] \
            + params["bn_beta"][i]
        w = params["w"][i]
        if matmul_bf16:
            h = jnp.dot(x.astype(jnp.bfloat16), w.astype(jnp.bfloat16),
                        preferred_element_type=jnp.float32) + params["b"][i]
        else:
            h = x @ w + params["b"][i]
        x = jnp.where(h > 0, h, LEAKY_SLOPE * h)
    w_out = params["w_out"]
    if matmul_bf16:
        y = jnp.dot(x.astype(jnp.bfloat16), w_out.astype(jnp.bfloat16),
                    preferred_element_type=jnp.float32) + params["b_out"]
    else:
        y = x @ w_out + params["b_out"]
    return jnp.tanh(y)


if __name__ == "__main__":
    # Small shapes consistent with the module's forward: state vector input of
    # shape (batch, state_size). Widths chosen so padded layer widths differ
    # (128 / 256 / 128 / 128) to exercise the per-layer padding, and batch=13
    # (< batch_pad=16) to exercise the masked batch statistics.
    batch = 13
    state_size = 33
    hidden_layers = [160, 96]
    action_size = 4

    key = jax.random.PRNGKey(0)
    k_param, k_x = jax.random.split(key)
    params = init_actor_params(k_param, state_size, hidden_layers, action_size)
    x = jax.random.normal(k_x, (batch, state_size), jnp.float32)

    out = actor_forward(x, params)
    out = jax.block_until_ready(out)
    assert out.shape == (batch, action_size)

    # Tight check vs a reference that mirrors the kernel's bf16 matmul operands.
    ref_bf16 = actor_forward_ref(x, params, matmul_bf16=True)
    assert jnp.allclose(out, ref_bf16, atol=1e-3, rtol=1e-3), \
        "mismatch vs bf16-operand reference"

    # Loose sanity check vs the full-f32 module semantics (bf16 weight cast
    # intentionally loosens this tolerance).
    ref_f32 = actor_forward_ref(x, params, matmul_bf16=False)
    assert jnp.allclose(out, ref_f32, atol=1e-2, rtol=1e-1), \
        "mismatch vs f32 reference"

    print("KERNEL_OK")
</pallas_src>

<mosaic_0001>
module attributes {stable_mosaic.version = 11 : i64} {
  func.func @_actor_kernel(%arg0: memref<16x128xf32, #tpu.memory_space<vmem>>, %arg1: memref<8x256xf32, #tpu.memory_space<vmem>>, %arg2: memref<128x256xbf16, #tpu.memory_space<vmem>>, %arg3: memref<256x128xbf16, #tpu.memory_space<vmem>>, %arg4: memref<128x128xbf16, #tpu.memory_space<vmem>>, %arg5: memref<16x128xf32, #tpu.memory_space<vmem>>) attributes {dimension_semantics = [], scalar_prefetch = 0 : i64, scratch_operands = 0 : i64, tpu.core_type = #tpu.core_type<tc>} {
    %c0 = arith.constant 0 : index
    %c0_0 = arith.constant 0 : index
    %0 = vector.load %arg0[%c0, %c0_0] : memref<16x128xf32, #tpu.memory_space<vmem>>, vector<16x128xf32>
    %c0_1 = arith.constant 0 : index
    %c0_2 = arith.constant 0 : index
    %1 = vector.load %arg1[%c0_1, %c0_2] : memref<8x256xf32, #tpu.memory_space<vmem>>, vector<8x256xf32>
    %2 = tpu.iota {dimensions = array<i32: 0>} : vector<16x1xi32>
    %c13_i32 = arith.constant 13 : i32
    %3 = vector.broadcast %c13_i32 : i32 to vector<16x1xi32>
    %4 = arith.cmpi slt, %2, %3 : vector<16x1xi32>
    %5 = arith.extui %4 : vector<16x1xi1> to vector<16x1xi32>
    %6 = arith.sitofp %5 : vector<16x1xi32> to vector<16x1xf32>
    %7 = vector.extract_strided_slice %1 {offsets = [0, 0], sizes = [1, 128], strides = [1, 1]} : vector<8x256xf32> to vector<1x128xf32>
    %8 = vector.extract_strided_slice %1 {offsets = [1, 0], sizes = [1, 128], strides = [1, 1]} : vector<8x256xf32> to vector<1x128xf32>
    %9 = vector.extract_strided_slice %1 {offsets = [2, 0], sizes = [1, 256], strides = [1, 1]} : vector<8x256xf32> to vector<1x256xf32>
    %10 = vector.broadcast %6 : vector<16x1xf32> to vector<16x128xf32>
    %11 = arith.mulf %0, %10 : vector<16x128xf32>
    %cst = arith.constant dense<0.000000e+00> : vector<128xf32>
    %12 = vector.multi_reduction <add>, %11, %cst [0] : vector<16x128xf32> to vector<128xf32>
    %13 = vector.shape_cast %12 : vector<128xf32> to vector<1x128xf32>
    %cst_3 = arith.constant 0.0769230798 : f32
    %14 = vector.broadcast %cst_3 : f32 to vector<1x128xf32>
    %15 = arith.mulf %13, %14 : vector<1x128xf32>
    %16 = vector.broadcast %15 : vector<1x128xf32> to vector<16x128xf32>
    %17 = arith.subf %0, %16 : vector<16x128xf32>
    %18 = arith.mulf %17, %17 : vector<16x128xf32>
    %19 = vector.broadcast %6 : vector<16x1xf32> to vector<16x128xf32>
    %20 = arith.mulf %18, %19 : vector<16x128xf32>
    %cst_4 = arith.constant dense<0.000000e+00> : vector<128xf32>
    %21 = vector.multi_reduction <add>, %20, %cst_4 [0] : vector<16x128xf32> to vector<128xf32>
    %22 = vector.shape_cast %21 : vector<128xf32> to vector<1x128xf32>
    %cst_5 = arith.constant 0.0769230798 : f32
    %23 = vector.broadcast %cst_5 : f32 to vector<1x128xf32>
    %24 = arith.mulf %22, %23 : vector<1x128xf32>
    %cst_6 = arith.constant 9.99999974E-6 : f32
    %25 = vector.broadcast %cst_6 : f32 to vector<1x128xf32>
    %26 = arith.addf %24, %25 : vector<1x128xf32>
    %27 = math.rsqrt %26 : vector<1x128xf32>
    %28 = arith.mulf %27, %7 : vector<1x128xf32>
    %29 = vector.broadcast %28 : vector<1x128xf32> to vector<16x128xf32>
    %30 = arith.mulf %17, %29 : vector<16x128xf32>
    %31 = vector.broadcast %8 : vector<1x128xf32> to vector<16x128xf32>
    %32 = arith.addf %30, %31 : vector<16x128xf32>
    %33 = arith.truncf %32 : vector<16x128xf32> to vector<16x128xbf16>
    %c0_7 = arith.constant 0 : index
    %c0_8 = arith.constant 0 : index
    %34 = vector.load %arg2[%c0_7, %c0_8] : memref<128x256xbf16, #tpu.memory_space<vmem>>, vector<128x256xbf16>
    %cst_9 = arith.constant dense<0.000000e+00> : vector<16x256xf32>
    %35 = tpu.matmul %33, %34, %cst_9 {dimension_numbers = #tpu.dot_dimension_numbers<[1], [0], [0], [1], [0, 0, 1, 1], [], []>} : vector<16x128xbf16>, vector<128x256xbf16>, vector<16x256xf32> -> vector<16x256xf32>
    %36 = vector.broadcast %9 : vector<1x256xf32> to vector<16x256xf32>
    %37 = arith.addf %35, %36 : vector<16x256xf32>
    %cst_10 = arith.constant 0.000000e+00 : f32
    %38 = vector.broadcast %cst_10 : f32 to vector<16x256xf32>
    %39 = arith.cmpf ogt, %37, %38 : vector<16x256xf32>
    %cst_11 = arith.constant 0.00999999977 : f32
    %40 = vector.broadcast %cst_11 : f32 to vector<16x256xf32>
    %41 = arith.mulf %40, %37 : vector<16x256xf32>
    %42 = arith.select %39, %37, %41 : vector<16x256xi1>, vector<16x256xf32>
    %43 = vector.extract_strided_slice %1 {offsets = [3, 0], sizes = [1, 256], strides = [1, 1]} : vector<8x256xf32> to vector<1x256xf32>
    %44 = vector.extract_strided_slice %1 {offsets = [4, 0], sizes = [1, 256], strides = [1, 1]} : vector<8x256xf32> to vector<1x256xf32>
    %45 = vector.extract_strided_slice %1 {offsets = [5, 0], sizes = [1, 128], strides = [1, 1]} : vector<8x256xf32> to vector<1x128xf32>
    %46 = vector.broadcast %6 : vector<16x1xf32> to vector<16x256xf32>
    %47 = arith.mulf %42, %46 : vector<16x256xf32>
    %cst_12 = arith.constant dense<0.000000e+00> : vector<256xf32>
    %48 = vector.multi_reduction <add>, %47, %cst_12 [0] : vector<16x256xf32> to vector<256xf32>
    %49 = vector.shape_cast %48 : vector<256xf32> to vector<1x256xf32>
    %cst_13 = arith.constant 0.0769230798 : f32
    %50 = vector.broadcast %cst_13 : f32 to vector<1x256xf32>
    %51 = arith.mulf %49, %50 : vector<1x256xf32>
    %52 = vector.broadcast %51 : vector<1x256xf32> to vector<16x256xf32>
    %53 = arith.subf %42, %52 : vector<16x256xf32>
    %54 = arith.mulf %53, %53 : vector<16x256xf32>
    %55 = vector.broadcast %6 : vector<16x1xf32> to vector<16x256xf32>
    %56 = arith.mulf %54, %55 : vector<16x256xf32>
    %cst_14 = arith.constant dense<0.000000e+00> : vector<256xf32>
    %57 = vector.multi_reduction <add>, %56, %cst_14 [0] : vector<16x256xf32> to vector<256xf32>
    %58 = vector.shape_cast %57 : vector<256xf32> to vector<1x256xf32>
    %cst_15 = arith.constant 0.0769230798 : f32
    %59 = vector.broadcast %cst_15 : f32 to vector<1x256xf32>
    %60 = arith.mulf %58, %59 : vector<1x256xf32>
    %cst_16 = arith.constant 9.99999974E-6 : f32
    %61 = vector.broadcast %cst_16 : f32 to vector<1x256xf32>
    %62 = arith.addf %60, %61 : vector<1x256xf32>
    %63 = math.rsqrt %62 : vector<1x256xf32>
    %64 = arith.mulf %63, %43 : vector<1x256xf32>
    %65 = vector.broadcast %64 : vector<1x256xf32> to vector<16x256xf32>
    %66 = arith.mulf %53, %65 : vector<16x256xf32>
    %67 = vector.broadcast %44 : vector<1x256xf32> to vector<16x256xf32>
    %68 = arith.addf %66, %67 : vector<16x256xf32>
    %69 = arith.truncf %68 : vector<16x256xf32> to vector<16x256xbf16>
    %c0_17 = arith.constant 0 : index
    %c0_18 = arith.constant 0 : index
    %70 = vector.load %arg3[%c0_17, %c0_18] : memref<256x128xbf16, #tpu.memory_space<vmem>>, vector<256x128xbf16>
    %cst_19 = arith.constant dense<0.000000e+00> : vector<16x128xf32>
    %71 = tpu.matmul %69, %70, %cst_19 {dimension_numbers = #tpu.dot_dimension_numbers<[1], [0], [0], [1], [0, 0, 1, 1], [], []>} : vector<16x256xbf16>, vector<256x128xbf16>, vector<16x128xf32> -> vector<16x128xf32>
    %72 = vector.broadcast %45 : vector<1x128xf32> to vector<16x128xf32>
    %73 = arith.addf %71, %72 : vector<16x128xf32>
    %cst_20 = arith.constant 0.000000e+00 : f32
    %74 = vector.broadcast %cst_20 : f32 to vector<16x128xf32>
    %75 = arith.cmpf ogt, %73, %74 : vector<16x128xf32>
    %cst_21 = arith.constant 0.00999999977 : f32
    %76 = vector.broadcast %cst_21 : f32 to vector<16x128xf32>
    %77 = arith.mulf %76, %73 : vector<16x128xf32>
    %78 = arith.select %75, %73, %77 : vector<16x128xi1>, vector<16x128xf32>
    %79 = vector.extract_strided_slice %1 {offsets = [6, 0], sizes = [1, 128], strides = [1, 1]} : vector<8x256xf32> to vector<1x128xf32>
    %80 = arith.truncf %78 : vector<16x128xf32> to vector<16x128xbf16>
    %c0_22 = arith.constant 0 : index
    %c0_23 = arith.constant 0 : index
    %81 = vector.load %arg4[%c0_22, %c0_23] : memref<128x128xbf16, #tpu.memory_space<vmem>>, vector<128x128xbf16>
    %cst_24 = arith.constant dense<0.000000e+00> : vector<16x128xf32>
    %82 = tpu.matmul %80, %81, %cst_24 {dimension_numbers = #tpu.dot_dimension_numbers<[1], [0], [0], [1], [0, 0, 1, 1], [], []>} : vector<16x128xbf16>, vector<128x128xbf16>, vector<16x128xf32> -> vector<16x128xf32>
    %83 = vector.broadcast %79 : vector<1x128xf32> to vector<16x128xf32>
    %84 = arith.addf %82, %83 : vector<16x128xf32>
    %85 = math.tanh %84 : vector<16x128xf32>
    %c0_25 = arith.constant 0 : index
    %c0_26 = arith.constant 0 : index
    %86 = vector.load %arg5[%c0_25, %c0_26] : memref<16x128xf32, #tpu.memory_space<vmem>>, vector<16x128xf32>
    tpu.vector_store %arg5[%c0_25, %c0_26], %85 {strides = array<i32>} : memref<16x128xf32, #tpu.memory_space<vmem>>, vector<16x128xf32>,
    return
  }
}

</mosaic_0001>

<llo_original>
// kernel: tpu_custom_call.1
$region0: #{tpu_custom_call.1}
  #allocation0 [shape = 'u32[]', space=smem, size = 0x4, offset = 0x4, fixed_abs, tag = 'smem constant byte address 0x4 - core index']
  #allocation1 [shape = 'u32[144,128]{1,0:T(1,128)}', space=vmem, size = 0x12000, scoped, tag = 'internal scratch']
  %s0 = inlined_call_operand.hbm [shape: f32[16,128], index: 0, kind: input, shape index: {}]
  %s1 = inlined_call_operand.hbm [shape: f32[8,256], index: 1, kind: input, shape index: {}]
  %s2 = inlined_call_operand.hbm [shape: bf16[128,256], index: 2, kind: input, shape index: {}]
  %s3 = inlined_call_operand.hbm [shape: bf16[256,128], index: 3, kind: input, shape index: {}]
  %s4 = inlined_call_operand.hbm [shape: bf16[128,128], index: 4, kind: input, shape index: {}]
  %s5 = inlined_call_operand.hbm [shape: f32[16,128], index: 5, kind: output, shape index: {}]
  %s6 = sld [smem:[#allocation0]]
  $region50: #{tpu_custom_call.1} parent=0
    _
  %s8 = ssub.s32 1, %s6
  %s9 = scalar_select 0, %s8, %s6
  $region1: #{tpu_custom_call.1} parent=0
    #allocation2 [shape = 'u8[8192]{0}', space=vmem, size = 0x2000, scoped, tag = 'input window, operand 0, single buffered']
    #allocation3 [shape = 's32[1]{0}', space=sflag, size = 0x4, scoped, tag = 'scoped memory for tpu_custom_call.1']
    #allocation4 [shape = 's32[1]{0}', space=sflag, size = 0x4, scoped, tag = 'scoped memory for tpu_custom_call.1']
    #allocation5 [shape = 'u8[8192]{0}', space=vmem, size = 0x2000, scoped, tag = 'input window, operand 1, single buffered']
    #allocation6 [shape = 's32[1]{0}', space=sflag, size = 0x4, scoped, tag = 'scoped memory for tpu_custom_call.1']
    #allocation7 [shape = 'u8[65536]{0}', space=vmem, size = 0x10000, scoped, tag = 'input window, operand 2, single buffered']
    #allocation8 [shape = 'u8[65536]{0}', space=vmem, size = 0x10000, scoped, tag = 'input window, operand 3, single buffered']
    #allocation9 [shape = 's32[1]{0}', space=sflag, size = 0x4, scoped, tag = 'scoped memory for tpu_custom_call.1']
    #allocation10 [shape = 'u8[32768]{0}', space=vmem, size = 0x8000, scoped, tag = 'input window, operand 4, single buffered']
    #allocation11 [shape = 'u8[8192]{0}', space=vmem, size = 0x2000, scoped, tag = 'output window, operand 0, single buffered']
    %10 = vsyncpa [#allocation3], 0
    %11 = vsyncpa [#allocation6], 0
    %12 = vsyncpa [#allocation9], 0
    %13 = vsyncpa [#allocation4], 0
    // Predicated region
    $region2: #{tpu_custom_call.1} parent=1 // pred_check
      _
    $region3: #{tpu_custom_call.1} parent=1 // pred_check_branch
      %15 = sbr.rel (0) target = $region5
    $region4: #{tpu_custom_call.1} parent=1 // pred_region
      %s17 = ssub.s32 256, 256
      %18 = vsyncadd [#allocation3], %s17
      %s19 = sshll.u32 [#allocation2], 4
      %s20 = int_to_ptr.vmem [resolvable:$true] %s19
      %25 = dma.hbm_to_vmem [thread:$0]  %s0, 256, %s20, [#allocation3], 128, 128, 8
    $region5: #{tpu_custom_call.1} parent=1 // pred_fallthru
      _
    // Predicated region
    $region6: #{tpu_custom_call.1} parent=1 // pred_check
      _
    $region7: #{tpu_custom_call.1} parent=1 // pred_check_branch
      %27 = sbr.rel (0) target = $region9
    $region8: #{tpu_custom_call.1} parent=1 // pred_region
      %s29 = ssub.s32 256, 256
      %30 = vsyncadd [#allocation6], %s29
      %s32 = sshll.u32 [#allocation5], 4
      %s33 = int_to_ptr.vmem [resolvable:$true] %s32
      %35 = dma.hbm_to_vmem [thread:$0]  %s1, 256, %s33, [#allocation6]
    $region9: #{tpu_custom_call.1} parent=1 // pred_fallthru
      _
    // Predicated region
    $region10: #{tpu_custom_call.1} parent=1 // pred_check
      _
    $region11: #{tpu_custom_call.1} parent=1 // pred_check_branch
      %37 = sbr.rel (0) target = $region13
    $region12: #{tpu_custom_call.1} parent=1 // pred_region
      %s39 = ssub.s32 2048, 2048
      %40 = vsyncadd [#allocation6], %s39
      %s41 = sshll.u32 [#allocation7], 4
      %s42 = int_to_ptr.vmem [resolvable:$true] %s41
      %47 = dma.hbm_to_vmem [thread:$0]  %s2, 2048, %s42, [#allocation6], 128, 128, 8
    $region13: #{tpu_custom_call.1} parent=1 // pred_fallthru
      _
    // Predicated region
    $region14: #{tpu_custom_call.1} parent=1 // pred_check
      _
    $region15: #{tpu_custom_call.1} parent=1 // pred_check_branch
      %49 = sbr.rel (0) target = $region17
    $region16: #{tpu_custom_call.1} parent=1 // pred_region
      %s51 = ssub.s32 2048, 2048
      %52 = vsyncadd [#allocation9], %s51
      %s53 = sshll.u32 [#allocation8], 4
      %s54 = int_to_ptr.vmem [resolvable:$true] %s53
      %59 = dma.hbm_to_vmem [thread:$0]  %s3, 2048, %s54, [#allocation9], 64, 64, 4
    $region17: #{tpu_custom_call.1} parent=1 // pred_fallthru
      _
    // Predicated region
    $region18: #{tpu_custom_call.1} parent=1 // pred_check
      _
    $region19: #{tpu_custom_call.1} parent=1 // pred_check_branch
      %61 = sbr.rel (0) target = $region21
    $region20: #{tpu_custom_call.1} parent=1 // pred_region
      %s63 = ssub.s32 1024, 1024
      %64 = vsyncadd [#allocation9], %s63
      %s65 = sshll.u32 [#allocation10], 4
      %s66 = int_to_ptr.vmem [resolvable:$true] %s65
      %71 = dma.hbm_to_vmem [thread:$0]  %s4, 1024, %s66, [#allocation9], 64, 64, 4
    $region21: #{tpu_custom_call.1} parent=1 // pred_fallthru
      _
    // Predicated region
    $region22: #{tpu_custom_call.1} parent=1 // pred_check
      _
    $region23: #{tpu_custom_call.1} parent=1 // pred_check_branch
      %73 = sbr.rel (0) target = $region25
    $region24: #{tpu_custom_call.1} parent=1 // pred_region
      %74 = dma.done [#allocation3], 256
    $region25: #{tpu_custom_call.1} parent=1 // pred_fallthru
      _
    // Predicated region
    $region26: #{tpu_custom_call.1} parent=1 // pred_check
      _
    $region27: #{tpu_custom_call.1} parent=1 // pred_check_branch
      %76 = sbr.rel (0) target = $region29
    $region28: #{tpu_custom_call.1} parent=1 // pred_region
      %77 = dma.done [#allocation6], 256
    $region29: #{tpu_custom_call.1} parent=1 // pred_fallthru
      _
    // Predicated region
    $region30: #{tpu_custom_call.1} parent=1 // pred_check
      _
    $region31: #{tpu_custom_call.1} parent=1 // pred_check_branch
      %79 = sbr.rel (0) target = $region33
    $region32: #{tpu_custom_call.1} parent=1 // pred_region
      %80 = dma.done [#allocation6], 2048
    $region33: #{tpu_custom_call.1} parent=1 // pred_fallthru
      _
    // Predicated region
    $region34: #{tpu_custom_call.1} parent=1 // pred_check
      _
    $region35: #{tpu_custom_call.1} parent=1 // pred_check_branch
      %82 = sbr.rel (0) target = $region37
    $region36: #{tpu_custom_call.1} parent=1 // pred_region
      %83 = dma.done [#allocation9], 2048
    $region37: #{tpu_custom_call.1} parent=1 // pred_fallthru
      _
    // Predicated region
    $region38: #{tpu_custom_call.1} parent=1 // pred_check
      _
    $region39: #{tpu_custom_call.1} parent=1 // pred_check_branch
      %85 = sbr.rel (0) target = $region41
    $region40: #{tpu_custom_call.1} parent=1 // pred_region
      %86 = dma.done [#allocation9], 1024
    $region41: #{tpu_custom_call.1} parent=1 // pred_fallthru
      _
    %v88 = vld [vmem:[#allocation2] sm:$0xff]
    %v89 = vld [vmem:[#allocation2 + $0x8] sm:$0xff]
    %v90 = vld [vmem:[#allocation5] sm:$0xff]
    %v91 = vld [vmem:[#allocation5 + $0x8] sm:$0xff]
    %v92 = vlaneseq
    %v93 = vshrl.u32 %v92, 7
    %v94 = vadd.s32 %v93, 8
    %vm95 = vcmp.lt.s32.totalorder %v93, 13
    %vm96 = vcmp.lt.s32.totalorder %v94, 13
    %v97 = vsel %vm95, 1, 0
    %v98 = vsel %vm96, 1, 0
    %v99 = vcvt.s32.f32 %v97
    %v100 = vcvt.s32.f32 %v98
    %v101 = vmul.f32 %v88, %v99
    %v102 = vmul.f32 %v89, %v100
    %v103 = vadd.f32 %v101, %v102
    %v104 = vrot.slane %v103, 4
    %v105 = vadd.f32 %v103, %v104
    %v106 = vrot.slane %v105, 2
    %v107 = vadd.f32 %v105, %v106
    %v108 = vrot.slane %v107, 1
    %v109 = vadd.f32 %v107, %v108
    %v110 = vmul.f32 %v109, 0.07692308
    %v111 = vsub.f32 %v88, %v110
    %v112 = vsub.f32 %v89, %v110
    %v113 = vmul.f32 %v111, %v111
    %v114 = vmul.f32 %v112, %v112
    %v115 = vmul.f32 %v113, %v99
    %v116 = vmul.f32 %v114, %v100
    %v117 = vadd.f32 %v115, %v116
    %v118 = vrot.slane %v117, 4
    %v119 = vadd.f32 %v117, %v118
    %v120 = vrot.slane %v119, 2
    %v121 = vadd.f32 %v119, %v120
    %v122 = vrot.slane %v121, 1
    %v123 = vadd.f32 %v121, %v122
    %v124 = vmul.f32 %v123, 0.07692308
    %v125 = vadd.f32 %v124, 1e-05
    %v126 = vrsqrt.pop %v125
    %v127 = vmul.f32 %v126, %v90
    %v128 = vlaneseq
    %v129 = vshrl.u32 %v128, 7
    %v130 = vsub.s32 0, %v129
    %v131 = vrot.slane %v127, %v130
    %v132 = vmul.f32 %v111, %v131
    %v133 = vmul.f32 %v112, %v131
    %v134 = vlaneseq
    %v135 = vshrl.u32 %v134, 7
    %v136 = vsub.s32 1, %v135
    %v137 = vrot.slane %v90, %v136
    %v138 = vadd.f32 %v132, %v137
    %v139 = vadd.f32 %v133, %v137
    %v140 = vpack.c.bf16 %v139, %v138
    %v141 = vld [vmem:[#allocation7] sm:$0xff]
    %v142 = vld [vmem:[#allocation7 + $0x8] sm:$0xff]
    %v143 = vld [vmem:[#allocation7 + $0x10] sm:$0xff]
    %v144 = vld [vmem:[#allocation7 + $0x18] sm:$0xff]
    %v145 = vld [vmem:[#allocation7 + $0x20] sm:$0xff]
    %v146 = vld [vmem:[#allocation7 + $0x28] sm:$0xff]
    %v147 = vld [vmem:[#allocation7 + $0x30] sm:$0xff]
    %v148 = vld [vmem:[#allocation7 + $0x38] sm:$0xff]
    %v149 = vld [vmem:[#allocation7 + $0x40] sm:$0xff]
    %v150 = vld [vmem:[#allocation7 + $0x48] sm:$0xff]
    %v151 = vld [vmem:[#allocation7 + $0x50] sm:$0xff]
    %v152 = vld [vmem:[#allocation7 + $0x58] sm:$0xff]
    %v153 = vld [vmem:[#allocation7 + $0x60] sm:$0xff]
    %v154 = vld [vmem:[#allocation7 + $0x68] sm:$0xff]
    %v155 = vld [vmem:[#allocation7 + $0x70] sm:$0xff]
    %v156 = vld [vmem:[#allocation7 + $0x78] sm:$0xff]
    %v157 = vlaneseq
    %v158 = vshrl.u32 %v157, 7
    %v159 = vsub.s32 2, %v158
    %v160 = vrot.slane %v90, %v159
    %v161 = vlaneseq
    %v162 = vshrl.u32 %v161, 7
    %v163 = vsub.s32 2, %v162
    %v164 = vrot.slane %v91, %v163
    %v181 = vunpack.c.l.b16 %v141
    %v182 = vunpack.c.h.b16 %v141
    %v183 = vunpack.c.l.b16 %v142
    %v184 = vunpack.c.h.b16 %v142
    %v185 = vunpack.c.l.b16 %v143
    %v186 = vunpack.c.h.b16 %v143
    %v187 = vunpack.c.l.b16 %v144
    %v188 = vunpack.c.h.b16 %v144
    %v189 = vunpack.c.l.b16 %v145
    %v190 = vunpack.c.h.b16 %v145
    %v191 = vunpack.c.l.b16 %v146
    %v192 = vunpack.c.h.b16 %v146
    %v193 = vunpack.c.l.b16 %v147
    %v194 = vunpack.c.h.b16 %v147
    %v195 = vunpack.c.l.b16 %v148
    %v196 = vunpack.c.h.b16 %v148
    %v197 = vunpack.c.l.b16 %v149
    %v198 = vunpack.c.h.b16 %v149
    %v199 = vunpack.c.l.b16 %v150
    %v200 = vunpack.c.h.b16 %v150
    %v201 = vunpack.c.l.b16 %v151
    %v202 = vunpack.c.h.b16 %v151
    %v203 = vunpack.c.l.b16 %v152
    %v204 = vunpack.c.h.b16 %v152
    %v205 = vunpack.c.l.b16 %v153
    %v206 = vunpack.c.h.b16 %v153
    %v207 = vunpack.c.l.b16 %v154
    %v208 = vunpack.c.h.b16 %v154
    %v209 = vunpack.c.l.b16 %v155
    %v210 = vunpack.c.h.b16 %v155
    %v211 = vunpack.c.l.b16 %v156
    %v212 = vunpack.c.h.b16 %v156
    %v213 = vpack.c.b16 %v183, %v181
    %v214 = vpack.c.b16 %v184, %v182
    %v215 = vpack.c.b16 %v187, %v185
    %v216 = vpack.c.b16 %v188, %v186
    %v217 = vpack.c.b16 %v191, %v189
    %v218 = vpack.c.b16 %v192, %v190
    %v219 = vpack.c.b16 %v195, %v193
    %v220 = vpack.c.b16 %v196, %v194
    %v221 = vpack.c.b16 %v199, %v197
    %v222 = vpack.c.b16 %v200, %v198
    %v223 = vpack.c.b16 %v203, %v201
    %v224 = vpack.c.b16 %v204, %v202
    %v225 = vpack.c.b16 %v207, %v205
    %v226 = vpack.c.b16 %v208, %v206
    %v227 = vpack.c.b16 %v211, %v209
    %v228 = vpack.c.b16 %v212, %v210
    %245 = vmatprep.subr.bf16.mxu0 %v214
    %246 = vmatpush1.bf16.msra.mxu0 %v213
    %247 = vmatprep.subr.bf16.mxu0 %v216
    %248 = vmatpush1.bf16.msra.mxu0 %v215
    %249 = vmatprep.subr.bf16.mxu0 %v218
    %250 = vmatpush1.bf16.msra.mxu0 %v217
    %251 = vmatprep.subr.bf16.mxu0 %v220
    %252 = vmatpush1.bf16.msra.mxu0 %v219
    %253 = vmatprep.subr.bf16.mxu0 %v222
    %254 = vmatpush1.bf16.msra.mxu0 %v221
    %255 = vmatprep.subr.bf16.mxu0 %v224
    %256 = vmatpush1.bf16.msra.mxu0 %v223
    %257 = vmatprep.subr.bf16.mxu0 %v226
    %258 = vmatpush1.bf16.msra.mxu0 %v225
    %259 = vmatprep.subr.bf16.mxu0 %v228
    %260 = vmatpush1.bf16.msra.mxu0 %v227
    %261 = vmatprep.subr.bf16.mxu0 0
    %262 = vmatpush1.bf16.msra.mxu0 0
    %263 = vmatprep.subr.bf16.mxu0 0
    %264 = vmatpush1.bf16.msra.mxu0 0
    %265 = vmatprep.subr.bf16.mxu0 0
    %266 = vmatpush1.bf16.msra.mxu0 0
    %267 = vmatprep.subr.bf16.mxu0 0
    %268 = vmatpush1.bf16.msra.mxu0 0
    %269 = vmatprep.subr.bf16.mxu0 0
    %270 = vmatpush1.bf16.msra.mxu0 0
    %271 = vmatprep.subr.bf16.mxu0 0
    %272 = vmatpush1.bf16.msra.mxu0 0
    %273 = vmatprep.subr.bf16.mxu0 0
    %274 = vmatpush1.bf16.msra.mxu0 0
    %275 = vmatprep.subr.bf16.mxu0 0
    %276 = vmatpush1.bf16.msra.mxu0 0
    %277 = vmatprep.mubr.bf16.mxu0 0
    %278 = vmatmul.mubr.bf16.gmra.mrb[0].mxu0 %v140
    %v279 = vpop.f32.mrb[0].mxu0
    %v280 = vadd.f32 %v160, %v279
    %v281 = vpop.f32.mrb[0].mxu0
    %v282 = vadd.f32 %v164, %v281
    %v283 = vpop.f32.mrb[0].mxu0
    %v284 = vadd.f32 %v160, %v283
    %v285 = vpop.f32.mrb[0].mxu0
    %v286 = vadd.f32 %v164, %v285
    %287 = vdwg.mxu0
    %vm288 = vcmp.gt.f32.partialorder %v280, 0.0
    %vm289 = vcmp.gt.f32.partialorder %v282, 0.0
    %vm290 = vcmp.gt.f32.partialorder %v284, 0.0
    %vm291 = vcmp.gt.f32.partialorder %v286, 0.0
    %v292 = vmul.f32 %v280, 0.01
    %v293 = vmul.f32 %v282, 0.01
    %v294 = vmul.f32 %v284, 0.01
    %v295 = vmul.f32 %v286, 0.01
    %v296 = vsel %vm288, %v280, %v292
    %v297 = vsel %vm289, %v282, %v293
    %v298 = vsel %vm290, %v284, %v294
    %v299 = vsel %vm291, %v286, %v295
    %v300 = vmul.f32 %v296, %v99
    %v301 = vmul.f32 %v297, %v99
    %v302 = vmul.f32 %v298, %v100
    %v303 = vmul.f32 %v299, %v100
    %v304 = vadd.f32 %v300, %v302
    %v305 = vrot.slane %v304, 4
    %v306 = vadd.f32 %v304, %v305
    %v307 = vrot.slane %v306, 2
    %v308 = vadd.f32 %v306, %v307
    %v309 = vrot.slane %v308, 1
    %v310 = vadd.f32 %v308, %v309
    %v311 = vadd.f32 %v301, %v303
    %v312 = vrot.slane %v311, 4
    %v313 = vadd.f32 %v311, %v312
    %v314 = vrot.slane %v313, 2
    %v315 = vadd.f32 %v313, %v314
    %v316 = vrot.slane %v315, 1
    %v317 = vadd.f32 %v315, %v316
    %v318 = vmul.f32 %v310, 0.07692308
    %v319 = vmul.f32 %v317, 0.07692308
    %v320 = vsub.f32 %v296, %v318
    %v321 = vsub.f32 %v297, %v319
    %v322 = vsub.f32 %v298, %v318
    %v323 = vsub.f32 %v299, %v319
    %v324 = vmul.f32 %v320, %v320
    %v325 = vmul.f32 %v321, %v321
    %v326 = vmul.f32 %v322, %v322
    %v327 = vmul.f32 %v323, %v323
    %v328 = vmul.f32 %v324, %v99
    %v329 = vmul.f32 %v325, %v99
    %v330 = vmul.f32 %v326, %v100
    %v331 = vmul.f32 %v327, %v100
    %v332 = vadd.f32 %v328, %v330
    %v333 = vrot.slane %v332, 4
    %v334 = vadd.f32 %v332, %v333
    %v335 = vrot.slane %v334, 2
    %v336 = vadd.f32 %v334, %v335
    %v337 = vrot.slane %v336, 1
    %v338 = vadd.f32 %v336, %v337
    %v339 = vadd.f32 %v329, %v331
    %v340 = vrot.slane %v339, 4
    %v341 = vadd.f32 %v339, %v340
    %v342 = vrot.slane %v341, 2
    %v343 = vadd.f32 %v341, %v342
    %v344 = vrot.slane %v343, 1
    %v345 = vadd.f32 %v343, %v344
    %v346 = vmul.f32 %v338, 0.07692308
    %v347 = vmul.f32 %v345, 0.07692308
    %v348 = vadd.f32 %v346, 1e-05
    %v349 = vadd.f32 %v347, 1e-05
    %v350 = vrsqrt.pop %v348
    %v351 = vrsqrt.pop %v349
    %v352 = vmul.f32 %v350, %v90
    %v353 = vmul.f32 %v351, %v91
    %v354 = vlaneseq
    %v355 = vshrl.u32 %v354, 7
    %v356 = vsub.s32 3, %v355
    %v357 = vrot.slane %v352, %v356
    %v358 = vlaneseq
    %v359 = vshrl.u32 %v358, 7
    %v360 = vsub.s32 3, %v359
    %v361 = vrot.slane %v353, %v360
    %v362 = vmul.f32 %v320, %v357
    %v363 = vmul.f32 %v321, %v361
    %v364 = vmul.f32 %v322, %v357
    %v365 = vmul.f32 %v323, %v361
    %v366 = vlaneseq
    %v367 = vshrl.u32 %v366, 7
    %v368 = vsub.s32 4, %v367
    %v369 = vrot.slane %v90, %v368
    %v370 = vlaneseq
    %v371 = vshrl.u32 %v370, 7
    %v372 = vsub.s32 4, %v371
    %v373 = vrot.slane %v91, %v372
    %v374 = vadd.f32 %v362, %v369
    %v375 = vadd.f32 %v363, %v373
    %v376 = vadd.f32 %v364, %v369
    %v377 = vadd.f32 %v365, %v373
    %v378 = vpack.c.bf16 %v376, %v374
    %v379 = vpack.c.bf16 %v377, %v375
    %v380 = vld [vmem:[#allocation8] sm:$0xf]
    %v381 = vld [vmem:[#allocation8 + $0x4] sm:$0xf]
    %v382 = vld [vmem:[#allocation8 + $0x8] sm:$0xf]
    %v383 = vld [vmem:[#allocation8 + $0xc] sm:$0xf]
    %v384 = vld [vmem:[#allocation8 + $0x10] sm:$0xf]
    %v385 = vld [vmem:[#allocation8 + $0x14] sm:$0xf]
    %v386 = vld [vmem:[#allocation8 + $0x18] sm:$0xf]
    %v387 = vld [vmem:[#allocation8 + $0x1c] sm:$0xf]
    %v388 = vld [vmem:[#allocation8 + $0x20] sm:$0xf]
    %v389 = vld [vmem:[#allocation8 + $0x24] sm:$0xf]
    %v390 = vld [vmem:[#allocation8 + $0x28] sm:$0xf]
    %v391 = vld [vmem:[#allocation8 + $0x2c] sm:$0xf]
    %v392 = vld [vmem:[#allocation8 + $0x30] sm:$0xf]
    %v393 = vld [vmem:[#allocation8 + $0x34] sm:$0xf]
    %v394 = vld [vmem:[#allocation8 + $0x38] sm:$0xf]
    %v395 = vld [vmem:[#allocation8 + $0x3c] sm:$0xf]
    %v396 = vld [vmem:[#allocation8 + $0x40] sm:$0xf]
    %v397 = vld [vmem:[#allocation8 + $0x44] sm:$0xf]
    %v398 = vld [vmem:[#allocation8 + $0x48] sm:$0xf]
    %v399 = vld [vmem:[#allocation8 + $0x4c] sm:$0xf]
    %v400 = vld [vmem:[#allocation8 + $0x50] sm:$0xf]
    %v401 = vld [vmem:[#allocation8 + $0x54] sm:$0xf]
    %v402 = vld [vmem:[#allocation8 + $0x58] sm:$0xf]
    %v403 = vld [vmem:[#allocation8 + $0x5c] sm:$0xf]
    %v404 = vld [vmem:[#allocation8 + $0x60] sm:$0xf]
    %v405 = vld [vmem:[#allocation8 + $0x64] sm:$0xf]
    %v406 = vld [vmem:[#allocation8 + $0x68] sm:$0xf]
    %v407 = vld [vmem:[#allocation8 + $0x6c] sm:$0xf]
    %v408 = vld [vmem:[#allocation8 + $0x70] sm:$0xf]
    %v409 = vld [vmem:[#allocation8 + $0x74] sm:$0xf]
    %v410 = vld [vmem:[#allocation8 + $0x78] sm:$0xf]
    %v411 = vld [vmem:[#allocation8 + $0x7c] sm:$0xf]
    %v412 = vlaneseq
    %v413 = vshrl.u32 %v412, 7
    %v414 = vsub.s32 5, %v413
    %v415 = vrot.slane %v90, %v414
    %v448 = vunpack.c.l.b16 %v380
    %v449 = vunpack.c.l.b16 %v381
    %v450 = vunpack.c.l.b16 %v382
    %v451 = vunpack.c.l.b16 %v383
    %v452 = vunpack.c.l.b16 %v384
    %v453 = vunpack.c.l.b16 %v385
    %v454 = vunpack.c.l.b16 %v386
    %v455 = vunpack.c.l.b16 %v387
    %v456 = vunpack.c.l.b16 %v388
    %v457 = vunpack.c.l.b16 %v389
    %v458 = vunpack.c.l.b16 %v390
    %v459 = vunpack.c.l.b16 %v391
    %v460 = vunpack.c.l.b16 %v392
    %v461 = vunpack.c.l.b16 %v393
    %v462 = vunpack.c.l.b16 %v394
    %v463 = vunpack.c.l.b16 %v395
    %v464 = vunpack.c.l.b16 %v396
    %v465 = vunpack.c.l.b16 %v397
    %v466 = vunpack.c.l.b16 %v398
    %v467 = vunpack.c.l.b16 %v399
    %v468 = vunpack.c.l.b16 %v400
    %v469 = vunpack.c.l.b16 %v401
    %v470 = vunpack.c.l.b16 %v402
    %v471 = vunpack.c.l.b16 %v403
    %v472 = vunpack.c.l.b16 %v404
    %v473 = vunpack.c.l.b16 %v405
    %v474 = vunpack.c.l.b16 %v406
    %v475 = vunpack.c.l.b16 %v407
    %v476 = vunpack.c.l.b16 %v408
    %v477 = vunpack.c.l.b16 %v409
    %v478 = vunpack.c.l.b16 %v410
    %v479 = vunpack.c.l.b16 %v411
    %v480 = vpack.c.b16 %v449, %v448
    %v481 = vpack.c.b16 %v451, %v450
    %v482 = vpack.c.b16 %v453, %v452
    %v483 = vpack.c.b16 %v455, %v454
    %v484 = vpack.c.b16 %v457, %v456
    %v485 = vpack.c.b16 %v459, %v458
    %v486 = vpack.c.b16 %v461, %v460
    %v487 = vpack.c.b16 %v463, %v462
    %v488 = vpack.c.b16 %v465, %v464
    %v489 = vpack.c.b16 %v467, %v466
    %v490 = vpack.c.b16 %v469, %v468
    %v491 = vpack.c.b16 %v471, %v470
    %v492 = vpack.c.b16 %v473, %v472
    %v493 = vpack.c.b16 %v475, %v474
    %v494 = vpack.c.b16 %v477, %v476
    %v495 = vpack.c.b16 %v479, %v478
    %512 = vmatprep.subr.bf16.mxu0 0
    %513 = vmatpush1.bf16.msra.mxu0 %v480
    %514 = vmatprep.subr.bf16.mxu0 0
    %515 = vmatpush1.bf16.msra.mxu0 %v481
    %516 = vmatprep.subr.bf16.mxu0 0
    %517 = vmatpush1.bf16.msra.mxu0 %v482
    %518 = vmatprep.subr.bf16.mxu0 0
    %519 = vmatpush1.bf16.msra.mxu0 %v483
    %520 = vmatprep.subr.bf16.mxu0 0
    %521 = vmatpush1.bf16.msra.mxu0 %v484
    %522 = vmatprep.subr.bf16.mxu0 0
    %523 = vmatpush1.bf16.msra.mxu0 %v485
    %524 = vmatprep.subr.bf16.mxu0 0
    %525 = vmatpush1.bf16.msra.mxu0 %v486
    %526 = vmatprep.subr.bf16.mxu0 0
    %527 = vmatpush1.bf16.msra.mxu0 %v487
    %528 = vmatprep.subr.bf16.mxu0 0
    %529 = vmatpush1.bf16.msra.mxu0 %v488
    %530 = vmatprep.subr.bf16.mxu0 0
    %531 = vmatpush1.bf16.msra.mxu0 %v489
    %532 = vmatprep.subr.bf16.mxu0 0
    %533 = vmatpush1.bf16.msra.mxu0 %v490
    %534 = vmatprep.subr.bf16.mxu0 0
    %535 = vmatpush1.bf16.msra.mxu0 %v491
    %536 = vmatprep.subr.bf16.mxu0 0
    %537 = vmatpush1.bf16.msra.mxu0 %v492
    %538 = vmatprep.subr.bf16.mxu0 0
    %539 = vmatpush1.bf16.msra.mxu0 %v493
    %540 = vmatprep.subr.bf16.mxu0 0
    %541 = vmatpush1.bf16.msra.mxu0 %v494
    %542 = vmatprep.subr.bf16.mxu0 0
    %543 = vmatpush1.bf16.msra.mxu0 %v495
    %544 = vmatprep.mubr.bf16.mxu0 %v379
    %545 = vmatmul.mubr.bf16.gmra.mrb[0].mxu0 %v378
    %v546 = vpop.f32.mrb[0].mxu0
    %v547 = vadd.f32 %v415, %v546
    %v548 = vpop.f32.mrb[0].mxu0
    %v549 = vpop.f32.mrb[0].mxu0
    %v550 = vadd.f32 %v415, %v549
    %v551 = vpop.f32.mrb[0].mxu0
    %552 = vdwg.mxu0
    %vm553 = vcmp.gt.f32.partialorder %v547, 0.0
    %vm554 = vcmp.gt.f32.partialorder %v550, 0.0
    %v555 = vmul.f32 %v547, 0.01
    %v556 = vmul.f32 %v550, 0.01
    %v557 = vsel %vm553, %v547, %v555
    %v558 = vsel %vm554, %v550, %v556
    %v559 = vpack.c.bf16 %v558, %v557
    %v560 = vld [vmem:[#allocation10] sm:$0xf]
    %v561 = vld [vmem:[#allocation10 + $0x4] sm:$0xf]
    %v562 = vld [vmem:[#allocation10 + $0x8] sm:$0xf]
    %v563 = vld [vmem:[#allocation10 + $0xc] sm:$0xf]
    %v564 = vld [vmem:[#allocation10 + $0x10] sm:$0xf]
    %v565 = vld [vmem:[#allocation10 + $0x14] sm:$0xf]
    %v566 = vld [vmem:[#allocation10 + $0x18] sm:$0xf]
    %v567 = vld [vmem:[#allocation10 + $0x1c] sm:$0xf]
    %v568 = vld [vmem:[#allocation10 + $0x20] sm:$0xf]
    %v569 = vld [vmem:[#allocation10 + $0x24] sm:$0xf]
    %v570 = vld [vmem:[#allocation10 + $0x28] sm:$0xf]
    %v571 = vld [vmem:[#allocation10 + $0x2c] sm:$0xf]
    %v572 = vld [vmem:[#allocation10 + $0x30] sm:$0xf]
    %v573 = vld [vmem:[#allocation10 + $0x34] sm:$0xf]
    %v574 = vld [vmem:[#allocation10 + $0x38] sm:$0xf]
    %v575 = vld [vmem:[#allocation10 + $0x3c] sm:$0xf]
    %v576 = vlaneseq
    %v577 = vshrl.u32 %v576, 7
    %v578 = vsub.s32 6, %v577
    %v579 = vrot.slane %v90, %v578
    %v596 = vunpack.c.l.b16 %v560
    %v597 = vunpack.c.l.b16 %v561
    %v598 = vunpack.c.l.b16 %v562
    %v599 = vunpack.c.l.b16 %v563
    %v600 = vunpack.c.l.b16 %v564
    %v601 = vunpack.c.l.b16 %v565
    %v602 = vunpack.c.l.b16 %v566
    %v603 = vunpack.c.l.b16 %v567
    %v604 = vunpack.c.l.b16 %v568
    %v605 = vunpack.c.l.b16 %v569
    %v606 = vunpack.c.l.b16 %v570
    %v607 = vunpack.c.l.b16 %v571
    %v608 = vunpack.c.l.b16 %v572
    %v609 = vunpack.c.l.b16 %v573
    %v610 = vunpack.c.l.b16 %v574
    %v611 = vunpack.c.l.b16 %v575
    %v612 = vpack.c.b16 %v597, %v596
    %v613 = vpack.c.b16 %v599, %v598
    %v614 = vpack.c.b16 %v601, %v600
    %v615 = vpack.c.b16 %v603, %v602
    %v616 = vpack.c.b16 %v605, %v604
    %v617 = vpack.c.b16 %v607, %v606
    %v618 = vpack.c.b16 %v609, %v608
    %v619 = vpack.c.b16 %v611, %v610
    %628 = vmatprep.subr.bf16.mxu0 0
    %629 = vmatpush1.bf16.msra.mxu0 %v612
    %630 = vmatprep.subr.bf16.mxu0 0
    %631 = vmatpush1.bf16.msra.mxu0 %v613
    %632 = vmatprep.subr.bf16.mxu0 0
    %633 = vmatpush1.bf16.msra.mxu0 %v614
    %634 = vmatprep.subr.bf16.mxu0 0
    %635 = vmatpush1.bf16.msra.mxu0 %v615
    %636 = vmatprep.subr.bf16.mxu0 0
    %637 = vmatpush1.bf16.msra.mxu0 %v616
    %638 = vmatprep.subr.bf16.mxu0 0
    %639 = vmatpush1.bf16.msra.mxu0 %v617
    %640 = vmatprep.subr.bf16.mxu0 0
    %641 = vmatpush1.bf16.msra.mxu0 %v618
    %642 = vmatprep.subr.bf16.mxu0 0
    %643 = vmatpush1.bf16.msra.mxu0 %v619
    %644 = vmatprep.subr.bf16.mxu0 0
    %645 = vmatpush1.bf16.msra.mxu0 0
    %646 = vmatprep.subr.bf16.mxu0 0
    %647 = vmatpush1.bf16.msra.mxu0 0
    %648 = vmatprep.subr.bf16.mxu0 0
    %649 = vmatpush1.bf16.msra.mxu0 0
    %650 = vmatprep.subr.bf16.mxu0 0
    %651 = vmatpush1.bf16.msra.mxu0 0
    %652 = vmatprep.subr.bf16.mxu0 0
    %653 = vmatpush1.bf16.msra.mxu0 0
    %654 = vmatprep.subr.bf16.mxu0 0
    %655 = vmatpush1.bf16.msra.mxu0 0
    %656 = vmatprep.subr.bf16.mxu0 0
    %657 = vmatpush1.bf16.msra.mxu0 0
    %658 = vmatprep.subr.bf16.mxu0 0
    %659 = vmatpush1.bf16.msra.mxu0 0
    %660 = vmatprep.mubr.bf16.mxu0 0
    %661 = vmatmul.mubr.bf16.gmra.mrb[0].mxu0 %v559
    %v662 = vpop.f32.mrb[0].mxu0
    %v663 = vadd.f32 %v579, %v662
    %v664 = vpop.f32.mrb[0].mxu0
    %v665 = vpop.f32.mrb[0].mxu0
    %v666 = vadd.f32 %v579, %v665
    %v667 = vpop.f32.mrb[0].mxu0
    %668 = vdwg.mxu0
    %v669 = vtanh.pop %v663
    %v670 = vtanh.pop %v666
    %671 = vst [vmem:[#allocation11] sm:$0xff] %v669
    %672 = vst [vmem:[#allocation11 + $0x8] sm:$0xff] %v670
    // Predicated region
    $region42: #{tpu_custom_call.1} parent=1 // pred_check
      _
    $region43: #{tpu_custom_call.1} parent=1 // pred_check_branch
      %674 = sbr.rel (0) target = $region45
    $region44: #{tpu_custom_call.1} parent=1 // pred_region
      %s676 = ssub.s32 256, 256
      %677 = vsyncadd [#allocation4], %s676
      %s678 = sshll.u32 [#allocation11], 4
      %s679 = int_to_ptr.vmem [resolvable:$true] %s678
      %684 = dma.vmem_to_hbm [thread:$0]  %s679, 256, %s5, [#allocation4], 128, 128, 8
    $region45: #{tpu_custom_call.1} parent=1 // pred_fallthru
      _
    // Predicated region
    $region46: #{tpu_custom_call.1} parent=1 // pred_check
      _
    $region47: #{tpu_custom_call.1} parent=1 // pred_check_branch
      %686 = sbr.rel (0) target = $region49
    $region48: #{tpu_custom_call.1} parent=1 // pred_region
      %687 = dma.done [#allocation4], 256
    $region49: #{tpu_custom_call.1} parent=1 // pred_fallthru
      _
    %688 = vsyncpa [#allocation3], 1
    %689 = vsyncpa [#allocation6], 1
    %690 = vsyncpa [#allocation9], 1
    %691 = vsyncpa [#allocation4], 1

</llo_original>
